<compile_context>
chip_gen: v5e
topology: v5e:2x2
jax: 0.10.0
libtpu: 0.0.40
codegen_flags: <defaults>
</compile_context>

<pallas_src>
import numpy as np
import jax
import jax.numpy as jnp
from jax.experimental import pallas as pl
from jax.experimental.pallas import tpu as pltpu

# ----------------------------- small config --------------------------------
N_WORDS, N_TAGS, N_CHARS, N_LEMMAS, N_LABELS = 20, 10, 15, 12, 8
N_EMBED, N_EMBED_PROJ, N_FEAT_EMBED, N_CHAR_EMBED = 16, 8, 8, 8
N_LSTM_HIDDEN, N_LSTM_LAYERS = 16, 3
N_MLP_EDGE, N_MLP_LABEL = 16, 16
PAD_INDEX, UNK_INDEX = 0, 1
B, L, FIX_LEN = 2, 8, 4
N_INPUT = N_EMBED + N_EMBED_PROJ + 3 * N_FEAT_EMBED          # word+proj(pretrained)+tag+char+lemma
H_ENC = 2 * N_LSTM_HIDDEN                                     # bidirectional encoder output

M1P = 128   # per-head / per-output-channel lane padding (one full 128-lane vreg)


def _round_up8(n):
    return ((n + 7) // 8) * 8


# ----------------------------- Pallas kernel --------------------------------
def biaffine_scores(x, Wed, bed, Weh, beh, Wld, bld, Wlh, blh, Ue, Ul):
    """x: [B, L, H_enc] -> (s_edge [B, L, L, 2], s_label [B, L, L, n_labels])."""
    Bn, Ln, H = x.shape
    ne, me = Ue.shape[0], Ue.shape[1]            # me = n_mlp_edge + 1
    nl, ml = Ul.shape[0], Ul.shape[1]            # ml = n_mlp_label + 1
    Ke, Kl = _round_up8(me), _round_up8(ml)      # trimmed K (sublane) padding, 17 -> 24
    n_all = ne + nl

    f32, bf16 = jnp.float32, jnp.bfloat16

    # --- weight preprocessing (tiny XLA ops, done outside the kernel) ---------
    def aug_pad(W, b):
        # torch Linear [out, in] -> [in, M1P]; fold the biaffine "+1" ones column
        # in as a zero weight column at index n_mlp with bias 1.0; zero-pad rest.
        n_mlp = W.shape[0]
        Wp = jnp.zeros((H, M1P), f32).at[:, :n_mlp].set(W.T.astype(f32))
        bp = (jnp.zeros((M1P,), f32)
              .at[:n_mlp].set(b.astype(f32))
              .at[n_mlp].set(1.0))
        return Wp, bp

    Wed_p, bed_p = aug_pad(Wed, bed)
    Weh_p, beh_p = aug_pad(Weh, beh)
    Wld_p, bld_p = aug_pad(Wld, bld)
    Wlh_p, blh_p = aug_pad(Wlh, blh)
    W_all = jnp.concatenate([Wed_p, Weh_p, Wld_p, Wlh_p], axis=1).astype(bf16)   # [H, 4*M1P] bf16
    b_all = jnp.concatenate([bed_p, beh_p, bld_p, blh_p], axis=0)[None, :]        # [1, 4*M1P] f32

    def flat_pad_U(U, k_pad):
        # [n_out, m1, m1] -> [k_pad, n_out*M1P] with column index = o*M1P + j
        n_out, m1, _ = U.shape
        Up = jnp.zeros((n_out, k_pad, M1P), f32).at[:, :m1, :m1].set(U.astype(f32))
        return Up.transpose(1, 0, 2).reshape(k_pad, n_out * M1P).astype(bf16)

    Ue_f = flat_pad_U(Ue, Ke)                                                     # [Ke, ne*M1P] bf16
    Ul_f = flat_pad_U(Ul, Kl)                                                     # [Kl, nl*M1P] bf16

    x2d = x.reshape(Bn * Ln, H).astype(bf16)     # batch folded into matmul rows

    def kernel(x_ref, w_ref, b_ref, ue_ref, ul_ref, out_ref):
        # Fused 4-head MLP (edge-d | edge-h | label-d | label-h) for all B*L rows.
        y = jnp.dot(x_ref[...], w_ref[...], preferred_element_type=f32) + b_ref[...]   # [B*L, 4*M1P]

        def first_contraction(d_off, k_pad, u_ref):
            # p[x, o*M1P + j] = sum_i d[x, i] * U[o, i, j], all output channels at once.
            d = y[:, d_off:d_off + k_pad].astype(bf16)                  # [B*L, k_pad]
            return jnp.dot(d, u_ref[...], preferred_element_type=f32)   # [B*L, n_out*M1P] f32

        p_edge = first_contraction(0 * M1P, Ke, ue_ref)
        p_label = first_contraction(2 * M1P, Kl, ul_ref)
        h_edge = y[:, 1 * M1P:2 * M1P]                                   # [B*L, M1P] f32
        h_label = y[:, 3 * M1P:4 * M1P]

        rows = []
        for b in range(Bn):                       # static, tiny per-batch second contraction
            r = b * Ln
            blocks = []
            for p_mat, h_mat, n_out in ((p_edge, h_edge, ne), (p_label, h_label, nl)):
                p_b = p_mat[r:r + Ln, :].astype(bf16)                    # [L, n_out*M1P]
                h_b = h_mat[r:r + Ln, :].astype(bf16)                    # [L, M1P]
                for o in range(n_out):
                    # contract lane dims of both operands -> transposed-operand MXU path
                    s = jax.lax.dot_general(
                        p_b[:, o * M1P:(o + 1) * M1P], h_b,
                        dimension_numbers=(((1,), (1,)), ((), ())),
                        preferred_element_type=f32)                      # [L, L]
                    blocks.append(s)
            rows.append(jnp.concatenate(blocks, axis=-1))                # [L, (ne+nl)*L]
        # One lane-dense store for the whole call.
        out_ref[...] = jnp.concatenate(rows, axis=0)                     # [B*L, (ne+nl)*L]

    # advisory cost estimate for XLA scheduling around the custom call
    flops = 2 * Bn * Ln * (H * 4 * M1P + Ke * ne * M1P + Kl * nl * M1P
                           + (ne + nl) * M1P * Ln)
    operands = (x2d, W_all, b_all, Ue_f, Ul_f)
    bytes_accessed = (sum(int(a.size) * a.dtype.itemsize for a in operands)
                      + Bn * Ln * n_all * Ln * 4)
    cost = pl.CostEstimate(flops=flops, transcendentals=0, bytes_accessed=bytes_accessed)

    vmem_spec = pl.BlockSpec(memory_space=pltpu.MemorySpace.VMEM)
    flat = pl.pallas_call(
        kernel,
        out_shape=jax.ShapeDtypeStruct((Bn * Ln, n_all * Ln), jnp.float32),
        in_specs=[vmem_spec] * 5,
        out_specs=vmem_spec,
        cost_estimate=cost,
    )(*operands)

    # per-head split + torch .permute(0, 2, 3, 1), done in the wrapper
    s_all = flat.reshape(Bn, Ln, n_all, Ln).transpose(0, 1, 3, 2)        # [B, L, L, ne+nl]
    return s_all[..., :ne], s_all[..., ne:]


# ------------------------- plain-JAX glue: encoders --------------------------
# TODO(synk): LSTM recurrences (CharLSTM + 3-layer bi-LSTM encoder) are inherently
# sequential; kept as lax.scan in plain JAX rather than a Pallas kernel.
def _lstm_dir(x, W_ih, W_hh, b_ih, b_hh, reverse=False):
    """Standard PyTorch LSTM cell semantics (gate order i,f,g,o). x:[N, T, D]."""
    if reverse:
        x = x[:, ::-1]
    N, Hd = x.shape[0], W_hh.shape[1]

    def step(carry, x_t):
        h, c = carry
        gates = x_t @ W_ih.T + b_ih + h @ W_hh.T + b_hh
        i, f, g, o = jnp.split(gates, 4, axis=-1)
        i, f, o = jax.nn.sigmoid(i), jax.nn.sigmoid(f), jax.nn.sigmoid(o)
        g = jnp.tanh(g)
        c = f * c + i * g
        h = o * jnp.tanh(c)
        return (h, c), h

    h0 = jnp.zeros((N, Hd), x.dtype)
    (hT, _), ys = jax.lax.scan(step, (h0, h0), jnp.swapaxes(x, 0, 1))
    ys = jnp.swapaxes(ys, 0, 1)
    if reverse:
        ys = ys[:, ::-1]
    return ys, hT


def _bilstm_layer(x, p_fwd, p_bwd):
    yf, hf = _lstm_dir(x, *p_fwd, reverse=False)
    yb, hb = _lstm_dir(x, *p_bwd, reverse=True)
    return jnp.concatenate([yf, yb], axis=-1), hf, hb


def char_lstm(chars, tbl, p_fwd, p_bwd):
    """chars:[B, L, F] -> [B, L, n_feat_embed] (final fwd||bwd hidden states)."""
    Bn, Ln, F = chars.shape
    ce = tbl[chars].reshape(Bn * Ln, F, tbl.shape[-1])
    _, hf, hb = _bilstm_layer(ce, p_fwd, p_bwd)
    return jnp.concatenate([hf, hb], axis=-1).reshape(Bn, Ln, -1)


def encode(words, chars, lemmas, tags, p):
    """Embeddings + 3-layer bi-LSTM encoder. Returns x:[B, L, 2*N_LSTM_HIDDEN]."""
    # mask = words != PAD_INDEX  -> all True in this synthetic setup, so
    # pack_padded_sequence/pad_packed_sequence are identity.
    word_e = p['word_embed'][words]                                       # [B,L,n_embed]
    pre_e = p['pretrained'][words] @ p['W_proj'].T + p['b_proj']          # [B,L,n_embed_proj]
    tag_e = p['tag_embed'][tags]
    char_e = char_lstm(chars, p['char_embed'], p['char_lstm_f'], p['char_lstm_b'])
    lemma_e = p['lemma_embed'][lemmas]
    # IndependentDropout in eval mode = identity
    embed = jnp.concatenate([word_e, pre_e, tag_e, char_e, lemma_e], axis=-1)
    x = embed
    for lf, lb in p['encoder']:
        x, _, _ = _bilstm_layer(x, lf, lb)                                # SharedDropout = identity
    return x


def forward(words, chars, lemmas, tags, p):
    x = encode(words, chars, lemmas, tags, p)
    # returns already in torch's permuted layout: [B,L,L,2], [B,L,L,n_labels]
    return biaffine_scores(
        x,
        p['W_edge_d'], p['b_edge_d'], p['W_edge_h'], p['b_edge_h'],
        p['W_label_d'], p['b_label_d'], p['W_label_h'], p['b_label_h'],
        p['U_edge'], p['U_label'])


# ------------------------------ parameter init -------------------------------
def init_params(key):
    keys = iter(jax.random.split(key, 80))

    def nrm(shape, s=0.1):
        return (s * jax.random.normal(next(keys), shape)).astype(jnp.float32)

    def lstm_dir_params(in_dim, hid):
        return (nrm((4 * hid, in_dim)), nrm((4 * hid, hid)),
                nrm((4 * hid,)), nrm((4 * hid,)))

    p = {
        'word_embed': nrm((N_WORDS, N_EMBED)),
        'pretrained': nrm((N_WORDS, N_EMBED)),
        'W_proj': nrm((N_EMBED_PROJ, N_EMBED)), 'b_proj': nrm((N_EMBED_PROJ,)),
        'tag_embed': nrm((N_TAGS, N_FEAT_EMBED)),
        'lemma_embed': nrm((N_LEMMAS, N_FEAT_EMBED)),
        'char_embed': nrm((N_CHARS, N_CHAR_EMBED)),
        'char_lstm_f': lstm_dir_params(N_CHAR_EMBED, N_FEAT_EMBED // 2),
        'char_lstm_b': lstm_dir_params(N_CHAR_EMBED, N_FEAT_EMBED // 2),
    }
    enc = []
    in_dim = N_INPUT
    for _ in range(N_LSTM_LAYERS):
        enc.append((lstm_dir_params(in_dim, N_LSTM_HIDDEN),
                    lstm_dir_params(in_dim, N_LSTM_HIDDEN)))
        in_dim = 2 * N_LSTM_HIDDEN
    p['encoder'] = enc
    # MLPs (torch Linear layout [out, in]); spec uses activation=False -> no LeakyReLU
    p['W_edge_d'], p['b_edge_d'] = nrm((N_MLP_EDGE, H_ENC)), nrm((N_MLP_EDGE,))
    p['W_edge_h'], p['b_edge_h'] = nrm((N_MLP_EDGE, H_ENC)), nrm((N_MLP_EDGE,))
    p['W_label_d'], p['b_label_d'] = nrm((N_MLP_LABEL, H_ENC)), nrm((N_MLP_LABEL,))
    p['W_label_h'], p['b_label_h'] = nrm((N_MLP_LABEL, H_ENC)), nrm((N_MLP_LABEL,))
    # Biaffine weights [n_out, n_in+1, n_in+1] (bias_x=bias_y=True)
    p['U_edge'] = nrm((2, N_MLP_EDGE + 1, N_MLP_EDGE + 1))
    p['U_label'] = nrm((N_LABELS, N_MLP_LABEL + 1, N_MLP_LABEL + 1))
    return p


# ------------------------------ pure-JAX reference ---------------------------
def reference_scores(x, p):
    def mlp(x, W, b):
        return x @ W.T + b
    ones = jnp.ones(x.shape[:-1] + (1,), x.dtype)
    ed = jnp.concatenate([mlp(x, p['W_edge_d'], p['b_edge_d']), ones], -1)
    eh = jnp.concatenate([mlp(x, p['W_edge_h'], p['b_edge_h']), ones], -1)
    ld = jnp.concatenate([mlp(x, p['W_label_d'], p['b_label_d']), ones], -1)
    lh = jnp.concatenate([mlp(x, p['W_label_h'], p['b_label_h']), ones], -1)
    se = jnp.einsum('bxi,oij,byj->boxy', ed, p['U_edge'], eh, precision='highest')
    sl = jnp.einsum('bxi,oij,byj->boxy', ld, p['U_label'], lh, precision='highest')
    return se.transpose(0, 2, 3, 1), sl.transpose(0, 2, 3, 1)


# ----------------------------------- main -------------------------------------
if __name__ == "__main__":
    root = jax.random.PRNGKey(0)
    kp, kw, kc, kl, kt = jax.random.split(root, 5)
    params = init_params(kp)

    # inputs: word/lemma indices avoid pad(0)/unk(1); chars avoid char pad(0)
    words = jax.random.randint(kw, (B, L), 2, N_WORDS, dtype=jnp.int32)
    chars = jax.random.randint(kc, (B, L, FIX_LEN), 1, N_CHARS, dtype=jnp.int32)
    lemmas = jax.random.randint(kl, (B, L), 2, N_LEMMAS, dtype=jnp.int32)
    tags = jax.random.randint(kt, (B, L), 0, N_TAGS, dtype=jnp.int32)

    s_edge, s_label = forward(words, chars, lemmas, tags, params)
    jax.block_until_ready((s_edge, s_label))

    assert s_edge.shape == (B, L, L, 2)
    assert s_label.shape == (B, L, L, N_LABELS)

    # sanity check kernel output against a pure-JAX f32 reference of the hot path.
    # (kernel uses bf16 MXU operands with f32 accumulation -> bf16-level tolerances)
    x_enc = encode(words, chars, lemmas, tags, params)
    se_ref, sl_ref = reference_scores(x_enc, params)
    np.testing.assert_allclose(np.asarray(s_edge), np.asarray(se_ref), rtol=2e-2, atol=2e-3)
    np.testing.assert_allclose(np.asarray(s_label), np.asarray(sl_ref), rtol=2e-2, atol=2e-3)

    print("KERNEL_OK")
</pallas_src>

<mosaic_0001>
module attributes {stable_mosaic.version = 11 : i64} {
  func.func @kernel(%arg0: memref<16x32xbf16, #tpu.memory_space<vmem>>, %arg1: memref<32x512xbf16, #tpu.memory_space<vmem>>, %arg2: memref<1x512xf32, #tpu.memory_space<vmem>>, %arg3: memref<24x256xbf16, #tpu.memory_space<vmem>>, %arg4: memref<24x1024xbf16, #tpu.memory_space<vmem>>, %arg5: memref<16x80xf32, #tpu.memory_space<vmem>>) attributes {dimension_semantics = [], scalar_prefetch = 0 : i64, scratch_operands = 0 : i64, tpu.core_type = #tpu.core_type<tc>} {
    %c0 = arith.constant 0 : index
    %c0_0 = arith.constant 0 : index
    %0 = vector.load %arg0[%c0, %c0_0] : memref<16x32xbf16, #tpu.memory_space<vmem>>, vector<16x32xbf16>
    %c0_1 = arith.constant 0 : index
    %c0_2 = arith.constant 0 : index
    %1 = vector.load %arg1[%c0_1, %c0_2] : memref<32x512xbf16, #tpu.memory_space<vmem>>, vector<32x512xbf16>
    %cst = arith.constant dense<0.000000e+00> : vector<16x512xf32>
    %2 = tpu.matmul %0, %1, %cst {dimension_numbers = #tpu.dot_dimension_numbers<[1], [0], [0], [1], [0, 0, 1, 1], [], []>} : vector<16x32xbf16>, vector<32x512xbf16>, vector<16x512xf32> -> vector<16x512xf32>
    %c0_3 = arith.constant 0 : index
    %c0_4 = arith.constant 0 : index
    %3 = vector.load %arg2[%c0_3, %c0_4] : memref<1x512xf32, #tpu.memory_space<vmem>>, vector<1x512xf32>
    %4 = vector.broadcast %3 : vector<1x512xf32> to vector<16x512xf32>
    %5 = arith.addf %2, %4 : vector<16x512xf32>
    %6 = vector.extract_strided_slice %5 {offsets = [0, 0], sizes = [16, 24], strides = [1, 1]} : vector<16x512xf32> to vector<16x24xf32>
    %7 = arith.truncf %6 : vector<16x24xf32> to vector<16x24xbf16>
    %c0_5 = arith.constant 0 : index
    %c0_6 = arith.constant 0 : index
    %8 = vector.load %arg3[%c0_5, %c0_6] : memref<24x256xbf16, #tpu.memory_space<vmem>>, vector<24x256xbf16>
    %cst_7 = arith.constant dense<0.000000e+00> : vector<16x256xf32>
    %9 = tpu.matmul %7, %8, %cst_7 {dimension_numbers = #tpu.dot_dimension_numbers<[1], [0], [0], [1], [0, 0, 1, 1], [], []>} : vector<16x24xbf16>, vector<24x256xbf16>, vector<16x256xf32> -> vector<16x256xf32>
    %10 = vector.extract_strided_slice %5 {offsets = [0, 256], sizes = [16, 24], strides = [1, 1]} : vector<16x512xf32> to vector<16x24xf32>
    %11 = arith.truncf %10 : vector<16x24xf32> to vector<16x24xbf16>
    %c0_8 = arith.constant 0 : index
    %c0_9 = arith.constant 0 : index
    %12 = vector.load %arg4[%c0_8, %c0_9] : memref<24x1024xbf16, #tpu.memory_space<vmem>>, vector<24x1024xbf16>
    %cst_10 = arith.constant dense<0.000000e+00> : vector<16x1024xf32>
    %13 = tpu.matmul %11, %12, %cst_10 {dimension_numbers = #tpu.dot_dimension_numbers<[1], [0], [0], [1], [0, 0, 1, 1], [], []>} : vector<16x24xbf16>, vector<24x1024xbf16>, vector<16x1024xf32> -> vector<16x1024xf32>
    %14 = vector.extract_strided_slice %5 {offsets = [0, 128], sizes = [16, 128], strides = [1, 1]} : vector<16x512xf32> to vector<16x128xf32>
    %15 = vector.extract_strided_slice %5 {offsets = [0, 384], sizes = [16, 128], strides = [1, 1]} : vector<16x512xf32> to vector<16x128xf32>
    %16 = vector.extract_strided_slice %9 {offsets = [0, 0], sizes = [8, 256], strides = [1, 1]} : vector<16x256xf32> to vector<8x256xf32>
    %17 = arith.truncf %16 : vector<8x256xf32> to vector<8x256xbf16>
    %18 = vector.extract_strided_slice %14 {offsets = [0, 0], sizes = [8, 128], strides = [1, 1]} : vector<16x128xf32> to vector<8x128xf32>
    %19 = arith.truncf %18 : vector<8x128xf32> to vector<8x128xbf16>
    %20 = vector.extract_strided_slice %17 {offsets = [0, 0], sizes = [8, 128], strides = [1, 1]} : vector<8x256xbf16> to vector<8x128xbf16>
    %cst_11 = arith.constant dense<0.000000e+00> : vector<8x8xf32>
    %21 = tpu.matmul %20, %19, %cst_11 {dimension_numbers = #tpu.dot_dimension_numbers<[1], [1], [0], [0], [0, 0, 1, 0], [], []>} : vector<8x128xbf16>, vector<8x128xbf16>, vector<8x8xf32> -> vector<8x8xf32>
    %22 = vector.extract_strided_slice %17 {offsets = [0, 128], sizes = [8, 128], strides = [1, 1]} : vector<8x256xbf16> to vector<8x128xbf16>
    %cst_12 = arith.constant dense<0.000000e+00> : vector<8x8xf32>
    %23 = tpu.matmul %22, %19, %cst_12 {dimension_numbers = #tpu.dot_dimension_numbers<[1], [1], [0], [0], [0, 0, 1, 0], [], []>} : vector<8x128xbf16>, vector<8x128xbf16>, vector<8x8xf32> -> vector<8x8xf32>
    %24 = vector.extract_strided_slice %13 {offsets = [0, 0], sizes = [8, 1024], strides = [1, 1]} : vector<16x1024xf32> to vector<8x1024xf32>
    %25 = arith.truncf %24 : vector<8x1024xf32> to vector<8x1024xbf16>
    %26 = vector.extract_strided_slice %15 {offsets = [0, 0], sizes = [8, 128], strides = [1, 1]} : vector<16x128xf32> to vector<8x128xf32>
    %27 = arith.truncf %26 : vector<8x128xf32> to vector<8x128xbf16>
    %28 = vector.extract_strided_slice %25 {offsets = [0, 0], sizes = [8, 128], strides = [1, 1]} : vector<8x1024xbf16> to vector<8x128xbf16>
    %cst_13 = arith.constant dense<0.000000e+00> : vector<8x8xf32>
    %29 = tpu.matmul %28, %27, %cst_13 {dimension_numbers = #tpu.dot_dimension_numbers<[1], [1], [0], [0], [0, 0, 1, 0], [], []>} : vector<8x128xbf16>, vector<8x128xbf16>, vector<8x8xf32> -> vector<8x8xf32>
    %30 = vector.extract_strided_slice %25 {offsets = [0, 128], sizes = [8, 128], strides = [1, 1]} : vector<8x1024xbf16> to vector<8x128xbf16>
    %cst_14 = arith.constant dense<0.000000e+00> : vector<8x8xf32>
    %31 = tpu.matmul %30, %27, %cst_14 {dimension_numbers = #tpu.dot_dimension_numbers<[1], [1], [0], [0], [0, 0, 1, 0], [], []>} : vector<8x128xbf16>, vector<8x128xbf16>, vector<8x8xf32> -> vector<8x8xf32>
    %32 = vector.extract_strided_slice %25 {offsets = [0, 256], sizes = [8, 128], strides = [1, 1]} : vector<8x1024xbf16> to vector<8x128xbf16>
    %cst_15 = arith.constant dense<0.000000e+00> : vector<8x8xf32>
    %33 = tpu.matmul %32, %27, %cst_15 {dimension_numbers = #tpu.dot_dimension_numbers<[1], [1], [0], [0], [0, 0, 1, 0], [], []>} : vector<8x128xbf16>, vector<8x128xbf16>, vector<8x8xf32> -> vector<8x8xf32>
    %34 = vector.extract_strided_slice %25 {offsets = [0, 384], sizes = [8, 128], strides = [1, 1]} : vector<8x1024xbf16> to vector<8x128xbf16>
    %cst_16 = arith.constant dense<0.000000e+00> : vector<8x8xf32>
    %35 = tpu.matmul %34, %27, %cst_16 {dimension_numbers = #tpu.dot_dimension_numbers<[1], [1], [0], [0], [0, 0, 1, 0], [], []>} : vector<8x128xbf16>, vector<8x128xbf16>, vector<8x8xf32> -> vector<8x8xf32>
    %36 = vector.extract_strided_slice %25 {offsets = [0, 512], sizes = [8, 128], strides = [1, 1]} : vector<8x1024xbf16> to vector<8x128xbf16>
    %cst_17 = arith.constant dense<0.000000e+00> : vector<8x8xf32>
    %37 = tpu.matmul %36, %27, %cst_17 {dimension_numbers = #tpu.dot_dimension_numbers<[1], [1], [0], [0], [0, 0, 1, 0], [], []>} : vector<8x128xbf16>, vector<8x128xbf16>, vector<8x8xf32> -> vector<8x8xf32>
    %38 = vector.extract_strided_slice %25 {offsets = [0, 640], sizes = [8, 128], strides = [1, 1]} : vector<8x1024xbf16> to vector<8x128xbf16>
    %cst_18 = arith.constant dense<0.000000e+00> : vector<8x8xf32>
    %39 = tpu.matmul %38, %27, %cst_18 {dimension_numbers = #tpu.dot_dimension_numbers<[1], [1], [0], [0], [0, 0, 1, 0], [], []>} : vector<8x128xbf16>, vector<8x128xbf16>, vector<8x8xf32> -> vector<8x8xf32>
    %40 = vector.extract_strided_slice %25 {offsets = [0, 768], sizes = [8, 128], strides = [1, 1]} : vector<8x1024xbf16> to vector<8x128xbf16>
    %cst_19 = arith.constant dense<0.000000e+00> : vector<8x8xf32>
    %41 = tpu.matmul %40, %27, %cst_19 {dimension_numbers = #tpu.dot_dimension_numbers<[1], [1], [0], [0], [0, 0, 1, 0], [], []>} : vector<8x128xbf16>, vector<8x128xbf16>, vector<8x8xf32> -> vector<8x8xf32>
    %42 = vector.extract_strided_slice %25 {offsets = [0, 896], sizes = [8, 128], strides = [1, 1]} : vector<8x1024xbf16> to vector<8x128xbf16>
    %cst_20 = arith.constant dense<0.000000e+00> : vector<8x8xf32>
    %43 = tpu.matmul %42, %27, %cst_20 {dimension_numbers = #tpu.dot_dimension_numbers<[1], [1], [0], [0], [0, 0, 1, 0], [], []>} : vector<8x128xbf16>, vector<8x128xbf16>, vector<8x8xf32> -> vector<8x8xf32>
    %44 = tpu.concatenate %21, %23, %29, %31, %33, %35, %37, %39, %41, %43 in 1 : vector<8x8xf32>, vector<8x8xf32>, vector<8x8xf32>, vector<8x8xf32>, vector<8x8xf32>, vector<8x8xf32>, vector<8x8xf32>, vector<8x8xf32>, vector<8x8xf32>, vector<8x8xf32> -> vector<8x80xf32>
    %45 = vector.extract_strided_slice %9 {offsets = [8, 0], sizes = [8, 256], strides = [1, 1]} : vector<16x256xf32> to vector<8x256xf32>
    %46 = arith.truncf %45 : vector<8x256xf32> to vector<8x256xbf16>
    %47 = vector.extract_strided_slice %14 {offsets = [8, 0], sizes = [8, 128], strides = [1, 1]} : vector<16x128xf32> to vector<8x128xf32>
    %48 = arith.truncf %47 : vector<8x128xf32> to vector<8x128xbf16>
    %49 = vector.extract_strided_slice %46 {offsets = [0, 0], sizes = [8, 128], strides = [1, 1]} : vector<8x256xbf16> to vector<8x128xbf16>
    %cst_21 = arith.constant dense<0.000000e+00> : vector<8x8xf32>
    %50 = tpu.matmul %49, %48, %cst_21 {dimension_numbers = #tpu.dot_dimension_numbers<[1], [1], [0], [0], [0, 0, 1, 0], [], []>} : vector<8x128xbf16>, vector<8x128xbf16>, vector<8x8xf32> -> vector<8x8xf32>
    %51 = vector.extract_strided_slice %46 {offsets = [0, 128], sizes = [8, 128], strides = [1, 1]} : vector<8x256xbf16> to vector<8x128xbf16>
    %cst_22 = arith.constant dense<0.000000e+00> : vector<8x8xf32>
    %52 = tpu.matmul %51, %48, %cst_22 {dimension_numbers = #tpu.dot_dimension_numbers<[1], [1], [0], [0], [0, 0, 1, 0], [], []>} : vector<8x128xbf16>, vector<8x128xbf16>, vector<8x8xf32> -> vector<8x8xf32>
    %53 = vector.extract_strided_slice %13 {offsets = [8, 0], sizes = [8, 1024], strides = [1, 1]} : vector<16x1024xf32> to vector<8x1024xf32>
    %54 = arith.truncf %53 : vector<8x1024xf32> to vector<8x1024xbf16>
    %55 = vector.extract_strided_slice %15 {offsets = [8, 0], sizes = [8, 128], strides = [1, 1]} : vector<16x128xf32> to vector<8x128xf32>
    %56 = arith.truncf %55 : vector<8x128xf32> to vector<8x128xbf16>
    %57 = vector.extract_strided_slice %54 {offsets = [0, 0], sizes = [8, 128], strides = [1, 1]} : vector<8x1024xbf16> to vector<8x128xbf16>
    %cst_23 = arith.constant dense<0.000000e+00> : vector<8x8xf32>
    %58 = tpu.matmul %57, %56, %cst_23 {dimension_numbers = #tpu.dot_dimension_numbers<[1], [1], [0], [0], [0, 0, 1, 0], [], []>} : vector<8x128xbf16>, vector<8x128xbf16>, vector<8x8xf32> -> vector<8x8xf32>
    %59 = vector.extract_strided_slice %54 {offsets = [0, 128], sizes = [8, 128], strides = [1, 1]} : vector<8x1024xbf16> to vector<8x128xbf16>
    %cst_24 = arith.constant dense<0.000000e+00> : vector<8x8xf32>
    %60 = tpu.matmul %59, %56, %cst_24 {dimension_numbers = #tpu.dot_dimension_numbers<[1], [1], [0], [0], [0, 0, 1, 0], [], []>} : vector<8x128xbf16>, vector<8x128xbf16>, vector<8x8xf32> -> vector<8x8xf32>
    %61 = vector.extract_strided_slice %54 {offsets = [0, 256], sizes = [8, 128], strides = [1, 1]} : vector<8x1024xbf16> to vector<8x128xbf16>
    %cst_25 = arith.constant dense<0.000000e+00> : vector<8x8xf32>
    %62 = tpu.matmul %61, %56, %cst_25 {dimension_numbers = #tpu.dot_dimension_numbers<[1], [1], [0], [0], [0, 0, 1, 0], [], []>} : vector<8x128xbf16>, vector<8x128xbf16>, vector<8x8xf32> -> vector<8x8xf32>
    %63 = vector.extract_strided_slice %54 {offsets = [0, 384], sizes = [8, 128], strides = [1, 1]} : vector<8x1024xbf16> to vector<8x128xbf16>
    %cst_26 = arith.constant dense<0.000000e+00> : vector<8x8xf32>
    %64 = tpu.matmul %63, %56, %cst_26 {dimension_numbers = #tpu.dot_dimension_numbers<[1], [1], [0], [0], [0, 0, 1, 0], [], []>} : vector<8x128xbf16>, vector<8x128xbf16>, vector<8x8xf32> -> vector<8x8xf32>
    %65 = vector.extract_strided_slice %54 {offsets = [0, 512], sizes = [8, 128], strides = [1, 1]} : vector<8x1024xbf16> to vector<8x128xbf16>
    %cst_27 = arith.constant dense<0.000000e+00> : vector<8x8xf32>
    %66 = tpu.matmul %65, %56, %cst_27 {dimension_numbers = #tpu.dot_dimension_numbers<[1], [1], [0], [0], [0, 0, 1, 0], [], []>} : vector<8x128xbf16>, vector<8x128xbf16>, vector<8x8xf32> -> vector<8x8xf32>
    %67 = vector.extract_strided_slice %54 {offsets = [0, 640], sizes = [8, 128], strides = [1, 1]} : vector<8x1024xbf16> to vector<8x128xbf16>
    %cst_28 = arith.constant dense<0.000000e+00> : vector<8x8xf32>
    %68 = tpu.matmul %67, %56, %cst_28 {dimension_numbers = #tpu.dot_dimension_numbers<[1], [1], [0], [0], [0, 0, 1, 0], [], []>} : vector<8x128xbf16>, vector<8x128xbf16>, vector<8x8xf32> -> vector<8x8xf32>
    %69 = vector.extract_strided_slice %54 {offsets = [0, 768], sizes = [8, 128], strides = [1, 1]} : vector<8x1024xbf16> to vector<8x128xbf16>
    %cst_29 = arith.constant dense<0.000000e+00> : vector<8x8xf32>
    %70 = tpu.matmul %69, %56, %cst_29 {dimension_numbers = #tpu.dot_dimension_numbers<[1], [1], [0], [0], [0, 0, 1, 0], [], []>} : vector<8x128xbf16>, vector<8x128xbf16>, vector<8x8xf32> -> vector<8x8xf32>
    %71 = vector.extract_strided_slice %54 {offsets = [0, 896], sizes = [8, 128], strides = [1, 1]} : vector<8x1024xbf16> to vector<8x128xbf16>
    %cst_30 = arith.constant dense<0.000000e+00> : vector<8x8xf32>
    %72 = tpu.matmul %71, %56, %cst_30 {dimension_numbers = #tpu.dot_dimension_numbers<[1], [1], [0], [0], [0, 0, 1, 0], [], []>} : vector<8x128xbf16>, vector<8x128xbf16>, vector<8x8xf32> -> vector<8x8xf32>
    %73 = tpu.concatenate %50, %52, %58, %60, %62, %64, %66, %68, %70, %72 in 1 : vector<8x8xf32>, vector<8x8xf32>, vector<8x8xf32>, vector<8x8xf32>, vector<8x8xf32>, vector<8x8xf32>, vector<8x8xf32>, vector<8x8xf32>, vector<8x8xf32>, vector<8x8xf32> -> vector<8x80xf32>
    %74 = tpu.concatenate %44, %73 in 0 : vector<8x80xf32>, vector<8x80xf32> -> vector<16x80xf32>
    %c0_31 = arith.constant 0 : index
    %c0_32 = arith.constant 0 : index
    %75 = vector.load %arg5[%c0_31, %c0_32] : memref<16x80xf32, #tpu.memory_space<vmem>>, vector<16x80xf32>
    tpu.vector_store %arg5[%c0_31, %c0_32], %74 {strides = array<i32>} : memref<16x80xf32, #tpu.memory_space<vmem>>, vector<16x80xf32>,
    return
  }
}

</mosaic_0001>

<llo_original>
// kernel: tpu_custom_call.1
$region0: #{tpu_custom_call.1}
  #allocation0 [shape = 'u32[]', space=smem, size = 0x4, offset = 0x4, fixed_abs, tag = 'smem constant byte address 0x4 - core index']
  #allocation1 [shape = 'u32[72,128]{1,0:T(1,128)}', space=vmem, size = 0x9000, scoped, tag = 'internal scratch']
  %s0 = inlined_call_operand.hbm [shape: bf16[16,32], index: 0, kind: input, shape index: {}]
  %s1 = inlined_call_operand.hbm [shape: bf16[32,512], index: 1, kind: input, shape index: {}]
  %s2 = inlined_call_operand.hbm [shape: f32[1,512], index: 2, kind: input, shape index: {}]
  %s3 = inlined_call_operand.hbm [shape: bf16[24,256], index: 3, kind: input, shape index: {}]
  %s4 = inlined_call_operand.hbm [shape: bf16[24,1024], index: 4, kind: input, shape index: {}]
  %s5 = inlined_call_operand.hbm [shape: f32[16,80], index: 5, kind: output, shape index: {}]
  %s6 = sld [smem:[#allocation0]]
  $region50: #{tpu_custom_call.1} parent=0
    _
  %s8 = ssub.s32 1, %s6
  %s9 = scalar_select 0, %s8, %s6
  $region1: #{tpu_custom_call.1} parent=0
    #allocation2 [shape = 'u8[4096]{0}', space=vmem, size = 0x1000, scoped, tag = 'input window, operand 0, single buffered']
    #allocation3 [shape = 's32[1]{0}', space=sflag, size = 0x4, scoped, tag = 'scoped memory for tpu_custom_call.1']
    #allocation4 [shape = 's32[1]{0}', space=sflag, size = 0x4, scoped, tag = 'scoped memory for tpu_custom_call.1']
    #allocation5 [shape = 'u8[32768]{0}', space=vmem, size = 0x8000, scoped, tag = 'input window, operand 1, single buffered']
    #allocation6 [shape = 's32[1]{0}', space=sflag, size = 0x4, scoped, tag = 'scoped memory for tpu_custom_call.1']
    #allocation7 [shape = 'u8[2048]{0}', space=vmem, size = 0x800, scoped, tag = 'input window, operand 2, single buffered']
    #allocation8 [shape = 'u8[12288]{0}', space=vmem, size = 0x3000, scoped, tag = 'input window, operand 3, single buffered']
    #allocation9 [shape = 's32[1]{0}', space=sflag, size = 0x4, scoped, tag = 'scoped memory for tpu_custom_call.1']
    #allocation10 [shape = 'u8[49152]{0}', space=vmem, size = 0xc000, scoped, tag = 'input window, operand 4, single buffered']
    #allocation11 [shape = 'u8[8192]{0}', space=vmem, size = 0x2000, scoped, tag = 'output window, operand 0, single buffered']
    %10 = vsyncpa [#allocation3], 0
    %11 = vsyncpa [#allocation6], 0
    %12 = vsyncpa [#allocation9], 0
    %13 = vsyncpa [#allocation4], 0
    // Predicated region
    $region2: #{tpu_custom_call.1} parent=1 // pred_check
      _
    $region3: #{tpu_custom_call.1} parent=1 // pred_check_branch
      %15 = sbr.rel (0) target = $region5
    $region4: #{tpu_custom_call.1} parent=1 // pred_region
      %17 = vsyncadd [#allocation3], 0
      %s18 = sshll.u32 %s0, 4
      %s19 = int_to_ptr.hbm [resolvable:$true] %s18
      %s20 = sshll.u32 [#allocation2], 4
      %s21 = int_to_ptr.vmem [resolvable:$true] %s20
      %26 = dma.hbm_to_vmem [thread:$0]  %s19, 128, %s21, [#allocation3], 64, 64, 4
    $region5: #{tpu_custom_call.1} parent=1 // pred_fallthru
      _
    // Predicated region
    $region6: #{tpu_custom_call.1} parent=1 // pred_check
      _
    $region7: #{tpu_custom_call.1} parent=1 // pred_check_branch
      %28 = sbr.rel (0) target = $region9
    $region8: #{tpu_custom_call.1} parent=1 // pred_region
      %30 = vsyncadd [#allocation6], 0
      %s31 = sshll.u32 %s1, 4
      %s32 = int_to_ptr.hbm [resolvable:$true] %s31
      %s33 = sshll.u32 [#allocation5], 4
      %s34 = int_to_ptr.vmem [resolvable:$true] %s33
      %39 = dma.hbm_to_vmem [thread:$0]  %s32, 1024, %s34, [#allocation6], 256, 256, 16
    $region9: #{tpu_custom_call.1} parent=1 // pred_fallthru
      _
    // Predicated region
    $region10: #{tpu_custom_call.1} parent=1 // pred_check
      _
    $region11: #{tpu_custom_call.1} parent=1 // pred_check_branch
      %41 = sbr.rel (0) target = $region13
    $region12: #{tpu_custom_call.1} parent=1 // pred_region
      %43 = vsyncadd [#allocation6], 0
      %s45 = sshll.u32 %s2, 4
      %s46 = int_to_ptr.hbm [resolvable:$true] %s45
      %s47 = sshll.u32 [#allocation7], 4
      %s48 = int_to_ptr.vmem [resolvable:$true] %s47
      %50 = dma.hbm_to_vmem [thread:$0]  %s46, 64, %s48, [#allocation6]
    $region13: #{tpu_custom_call.1} parent=1 // pred_fallthru
      _
    // Predicated region
    $region14: #{tpu_custom_call.1} parent=1 // pred_check
      _
    $region15: #{tpu_custom_call.1} parent=1 // pred_check_branch
      %52 = sbr.rel (0) target = $region17
    $region16: #{tpu_custom_call.1} parent=1 // pred_region
      %54 = vsyncadd [#allocation9], 0
      %s55 = sshll.u32 %s3, 4
      %s56 = int_to_ptr.hbm [resolvable:$true] %s55
      %s57 = sshll.u32 [#allocation8], 4
      %s58 = int_to_ptr.vmem [resolvable:$true] %s57
      %63 = dma.hbm_to_vmem [thread:$0]  %s56, 384, %s58, [#allocation9], 128, 128, 8
    $region17: #{tpu_custom_call.1} parent=1 // pred_fallthru
      _
    // Predicated region
    $region18: #{tpu_custom_call.1} parent=1 // pred_check
      _
    $region19: #{tpu_custom_call.1} parent=1 // pred_check_branch
      %65 = sbr.rel (0) target = $region21
    $region20: #{tpu_custom_call.1} parent=1 // pred_region
      %67 = vsyncadd [#allocation9], 0
      %s68 = sshll.u32 %s4, 4
      %s69 = int_to_ptr.hbm [resolvable:$true] %s68
      %s70 = sshll.u32 [#allocation10], 4
      %s71 = int_to_ptr.vmem [resolvable:$true] %s70
      %76 = dma.hbm_to_vmem [thread:$0]  %s69, 1536, %s71, [#allocation9], 512, 512, 32
    $region21: #{tpu_custom_call.1} parent=1 // pred_fallthru
      _
    // Predicated region
    $region22: #{tpu_custom_call.1} parent=1 // pred_check
      _
    $region23: #{tpu_custom_call.1} parent=1 // pred_check_branch
      %78 = sbr.rel (0) target = $region25
    $region24: #{tpu_custom_call.1} parent=1 // pred_region
      %80 = dma.done [#allocation3], 128
    $region25: #{tpu_custom_call.1} parent=1 // pred_fallthru
      _
    // Predicated region
    $region26: #{tpu_custom_call.1} parent=1 // pred_check
      _
    $region27: #{tpu_custom_call.1} parent=1 // pred_check_branch
      %82 = sbr.rel (0) target = $region29
    $region28: #{tpu_custom_call.1} parent=1 // pred_region
      %84 = dma.done [#allocation6], 1024
    $region29: #{tpu_custom_call.1} parent=1 // pred_fallthru
      _
    // Predicated region
    $region30: #{tpu_custom_call.1} parent=1 // pred_check
      _
    $region31: #{tpu_custom_call.1} parent=1 // pred_check_branch
      %86 = sbr.rel (0) target = $region33
    $region32: #{tpu_custom_call.1} parent=1 // pred_region
      %88 = dma.done [#allocation6], 64
    $region33: #{tpu_custom_call.1} parent=1 // pred_fallthru
      _
    // Predicated region
    $region34: #{tpu_custom_call.1} parent=1 // pred_check
      _
    $region35: #{tpu_custom_call.1} parent=1 // pred_check_branch
      %90 = sbr.rel (0) target = $region37
    $region36: #{tpu_custom_call.1} parent=1 // pred_region
      %92 = dma.done [#allocation9], 384
    $region37: #{tpu_custom_call.1} parent=1 // pred_fallthru
      _
    // Predicated region
    $region38: #{tpu_custom_call.1} parent=1 // pred_check
      _
    $region39: #{tpu_custom_call.1} parent=1 // pred_check_branch
      %94 = sbr.rel (0) target = $region41
    $region40: #{tpu_custom_call.1} parent=1 // pred_region
      %96 = dma.done [#allocation9], 1536
    $region41: #{tpu_custom_call.1} parent=1 // pred_fallthru
      _
    %v98 = vld [vmem:[#allocation2] sm:$0xf]
    %v99 = vld [vmem:[#allocation2 + $0x4] sm:$0xf]
    %v100 = vld [vmem:[#allocation5] sm:$0xff]
    %v101 = vld [vmem:[#allocation5 + $0x8] sm:$0xff]
    %v102 = vld [vmem:[#allocation5 + $0x10] sm:$0xff]
    %v103 = vld [vmem:[#allocation5 + $0x18] sm:$0xff]
    %v104 = vld [vmem:[#allocation5 + $0x20] sm:$0xff]
    %v105 = vld [vmem:[#allocation5 + $0x28] sm:$0xff]
    %v106 = vld [vmem:[#allocation5 + $0x30] sm:$0xff]
    %v107 = vld [vmem:[#allocation5 + $0x38] sm:$0xff]
    %v108 = vld [vmem:[#allocation7] sm:$0xf]
    %v110 = vperm.slane %v108, 0
    %v111 = vperm.slane %v108, 1
    %v112 = vperm.slane %v108, 2
    %v113 = vperm.slane %v108, 3
    %v120 = vunpack.c.l.b16 %v98
    %v121 = vunpack.c.l.b16 %v99
    %v122 = vpack.c.b16 %v121, %v120
    %v131 = vunpack.c.l.b16 %v100
    %v132 = vunpack.c.h.b16 %v100
    %v133 = vunpack.c.l.b16 %v101
    %v134 = vunpack.c.h.b16 %v101
    %v135 = vunpack.c.l.b16 %v102
    %v136 = vunpack.c.h.b16 %v102
    %v137 = vunpack.c.l.b16 %v103
    %v138 = vunpack.c.h.b16 %v103
    %v139 = vunpack.c.l.b16 %v104
    %v140 = vunpack.c.h.b16 %v104
    %v141 = vunpack.c.l.b16 %v105
    %v142 = vunpack.c.h.b16 %v105
    %v143 = vunpack.c.l.b16 %v106
    %v144 = vunpack.c.h.b16 %v106
    %v145 = vunpack.c.l.b16 %v107
    %v146 = vunpack.c.h.b16 %v107
    %v147 = vpack.c.b16 %v135, %v131
    %v148 = vpack.c.b16 %v136, %v132
    %v149 = vpack.c.b16 %v137, %v133
    %v150 = vpack.c.b16 %v138, %v134
    %v151 = vpack.c.b16 %v143, %v139
    %v152 = vpack.c.b16 %v144, %v140
    %v153 = vpack.c.b16 %v145, %v141
    %v154 = vpack.c.b16 %v146, %v142
    %vm163 = vcmask 261120
    %v165 = vsel %vm163, %v122, 0
    %167 = vmatpush.bf16.msra.mxu0 0
    %168 = vmatpush.bf16.msra.mxu0 0
    %169 = vmatpush.bf16.msra.mxu0 0
    %170 = vmatpush.bf16.msra.mxu0 0
    %171 = vmatpush.bf16.msra.mxu0 0
    %172 = vmatpush.bf16.msra.mxu0 0
    %173 = vmatpush.bf16.msra.mxu0 %v151
    %174 = vmatpush.bf16.msra.mxu0 %v147
    %175 = vmatmul.bf16.gmra.mxu0 %v165
    %v176 = vpop.f32.mrf.mxu0
    %v177 = vadd.f32 %v110, %v176
    %v178 = vpop.f32.mrf.mxu0
    %v179 = vadd.f32 %v110, %v178
    %180 = vdwg.mxu0
    %181 = vmatpush.bf16.msra.mxu0 0
    %182 = vmatpush.bf16.msra.mxu0 0
    %183 = vmatpush.bf16.msra.mxu0 0
    %184 = vmatpush.bf16.msra.mxu0 0
    %185 = vmatpush.bf16.msra.mxu0 0
    %186 = vmatpush.bf16.msra.mxu0 0
    %187 = vmatpush.bf16.msra.mxu0 %v152
    %188 = vmatpush.bf16.msra.mxu0 %v148
    %189 = vmatmul.bf16.gmra.mxu0 %v165
    %v190 = vpop.f32.mrf.mxu0
    %v191 = vadd.f32 %v111, %v190
    %v192 = vpop.f32.mrf.mxu0
    %v193 = vadd.f32 %v111, %v192
    %194 = vdwg.mxu0
    %195 = vmatpush.bf16.msra.mxu0 0
    %196 = vmatpush.bf16.msra.mxu0 0
    %197 = vmatpush.bf16.msra.mxu0 0
    %198 = vmatpush.bf16.msra.mxu0 0
    %199 = vmatpush.bf16.msra.mxu0 0
    %200 = vmatpush.bf16.msra.mxu0 0
    %201 = vmatpush.bf16.msra.mxu0 %v153
    %202 = vmatpush.bf16.msra.mxu0 %v149
    %203 = vmatmul.bf16.gmra.mxu0 %v165
    %v204 = vpop.f32.mrf.mxu0
    %v205 = vadd.f32 %v112, %v204
    %v206 = vpop.f32.mrf.mxu0
    %v207 = vadd.f32 %v112, %v206
    %208 = vdwg.mxu0
    %209 = vmatpush.bf16.msra.mxu0 0
    %210 = vmatpush.bf16.msra.mxu0 0
    %211 = vmatpush.bf16.msra.mxu0 0
    %212 = vmatpush.bf16.msra.mxu0 0
    %213 = vmatpush.bf16.msra.mxu0 0
    %214 = vmatpush.bf16.msra.mxu0 0
    %215 = vmatpush.bf16.msra.mxu0 %v154
    %216 = vmatpush.bf16.msra.mxu0 %v150
    %217 = vmatmul.bf16.gmra.mxu0 %v165
    %v218 = vpop.f32.mrf.mxu0
    %v219 = vadd.f32 %v113, %v218
    %v220 = vpop.f32.mrf.mxu0
    %v221 = vadd.f32 %v113, %v220
    %222 = vdwg.mxu0
    %v223 = vpack.c.bf16 %v179, %v177
    %v224 = vld [vmem:[#allocation8] sm:$0xff]
    %v225 = vld [vmem:[#allocation8 + $0x8] sm:$0xff]
    %v226 = vld [vmem:[#allocation8 + $0x10] sm:$0xff]
    %v230 = vunpack.c.l.b16 %v224
    %v231 = vunpack.c.h.b16 %v224
    %v232 = vunpack.c.l.b16 %v225
    %v233 = vunpack.c.h.b16 %v225
    %v234 = vunpack.c.l.b16 %v226
    %v235 = vunpack.c.h.b16 %v226
    %v236 = vpack.c.b16 %v232, %v230
    %v237 = vpack.c.b16 %v233, %v231
    %v238 = vpack.c.b16 %v234, %v234
    %v239 = vpack.c.b16 %v235, %v235
    %vm242 = vcmask 195584
    %v244 = vsel %vm242, %v223, 0
    %vm246 = vcmask 1043456
    %v248 = vsel %vm246, %v238, 0
    %v251 = vsel %vm246, %v239, 0
    %253 = vmatpush.bf16.msra.mxu0 0
    %254 = vmatpush.bf16.msra.mxu0 0
    %255 = vmatpush.bf16.msra.mxu0 0
    %256 = vmatpush.bf16.msra.mxu0 0
    %257 = vmatpush.bf16.msra.mxu0 0
    %258 = vmatpush.bf16.msra.mxu0 0
    %259 = vmatpush.bf16.msra.mxu0 %v248
    %260 = vmatpush.bf16.msra.mxu0 %v236
    %261 = vmatmul.bf16.gmra.mxu0 %v244
    %v262 = vpop.f32.mrf.mxu0
    %v263 = vadd.f32 0.0, %v262
    %v264 = vpop.f32.mrf.mxu0
    %v265 = vadd.f32 0.0, %v264
    %266 = vdwg.mxu0
    %267 = vmatpush.bf16.msra.mxu0 0
    %268 = vmatpush.bf16.msra.mxu0 0
    %269 = vmatpush.bf16.msra.mxu0 0
    %270 = vmatpush.bf16.msra.mxu0 0
    %271 = vmatpush.bf16.msra.mxu0 0
    %272 = vmatpush.bf16.msra.mxu0 0
    %273 = vmatpush.bf16.msra.mxu0 %v251
    %274 = vmatpush.bf16.msra.mxu0 %v237
    %275 = vmatmul.bf16.gmra.mxu0 %v244
    %v276 = vpop.f32.mrf.mxu0
    %v277 = vadd.f32 0.0, %v276
    %v278 = vpop.f32.mrf.mxu0
    %v279 = vadd.f32 0.0, %v278
    %280 = vdwg.mxu0
    %v281 = vpack.c.bf16 %v207, %v205
    %v282 = vld [vmem:[#allocation10] sm:$0xff]
    %v283 = vld [vmem:[#allocation10 + $0x8] sm:$0xff]
    %v284 = vld [vmem:[#allocation10 + $0x10] sm:$0xff]
    %v285 = vld [vmem:[#allocation10 + $0x18] sm:$0xff]
    %v286 = vld [vmem:[#allocation10 + $0x20] sm:$0xff]
    %v287 = vld [vmem:[#allocation10 + $0x28] sm:$0xff]
    %v288 = vld [vmem:[#allocation10 + $0x30] sm:$0xff]
    %v289 = vld [vmem:[#allocation10 + $0x38] sm:$0xff]
    %v290 = vld [vmem:[#allocation10 + $0x40] sm:$0xff]
    %v291 = vld [vmem:[#allocation10 + $0x48] sm:$0xff]
    %v292 = vld [vmem:[#allocation10 + $0x50] sm:$0xff]
    %v293 = vld [vmem:[#allocation10 + $0x58] sm:$0xff]
    %v306 = vunpack.c.l.b16 %v282
    %v307 = vunpack.c.h.b16 %v282
    %v308 = vunpack.c.l.b16 %v283
    %v309 = vunpack.c.h.b16 %v283
    %v310 = vunpack.c.l.b16 %v284
    %v311 = vunpack.c.h.b16 %v284
    %v312 = vunpack.c.l.b16 %v285
    %v313 = vunpack.c.h.b16 %v285
    %v314 = vunpack.c.l.b16 %v286
    %v315 = vunpack.c.h.b16 %v286
    %v316 = vunpack.c.l.b16 %v287
    %v317 = vunpack.c.h.b16 %v287
    %v318 = vunpack.c.l.b16 %v288
    %v319 = vunpack.c.h.b16 %v288
    %v320 = vunpack.c.l.b16 %v289
    %v321 = vunpack.c.h.b16 %v289
    %v322 = vunpack.c.l.b16 %v290
    %v323 = vunpack.c.h.b16 %v290
    %v324 = vunpack.c.l.b16 %v291
    %v325 = vunpack.c.h.b16 %v291
    %v326 = vunpack.c.l.b16 %v292
    %v327 = vunpack.c.h.b16 %v292
    %v328 = vunpack.c.l.b16 %v293
    %v329 = vunpack.c.h.b16 %v293
    %v330 = vpack.c.b16 %v314, %v306
    %v331 = vpack.c.b16 %v315, %v307
    %v332 = vpack.c.b16 %v316, %v308
    %v333 = vpack.c.b16 %v317, %v309
    %v334 = vpack.c.b16 %v318, %v310
    %v335 = vpack.c.b16 %v319, %v311
    %v336 = vpack.c.b16 %v320, %v312
    %v337 = vpack.c.b16 %v321, %v313
    %v338 = vpack.c.b16 %v322, %v322
    %v339 = vpack.c.b16 %v323, %v323
    %v340 = vpack.c.b16 %v324, %v324
    %v341 = vpack.c.b16 %v325, %v325
    %v342 = vpack.c.b16 %v326, %v326
    %v343 = vpack.c.b16 %v327, %v327
    %v344 = vpack.c.b16 %v328, %v328
    %v345 = vpack.c.b16 %v329, %v329
    %v355 = vsel %vm242, %v281, 0
    %v358 = vsel %vm246, %v338, 0
    %v361 = vsel %vm246, %v339, 0
    %v364 = vsel %vm246, %v340, 0
    %v367 = vsel %vm246, %v341, 0
    %v370 = vsel %vm246, %v342, 0
    %v373 = vsel %vm246, %v343, 0
    %v376 = vsel %vm246, %v344, 0
    %v379 = vsel %vm246, %v345, 0
    %381 = vmatpush.bf16.msra.mxu0 0
    %382 = vmatpush.bf16.msra.mxu0 0
    %383 = vmatpush.bf16.msra.mxu0 0
    %384 = vmatpush.bf16.msra.mxu0 0
    %385 = vmatpush.bf16.msra.mxu0 0
    %386 = vmatpush.bf16.msra.mxu0 0
    %387 = vmatpush.bf16.msra.mxu0 %v358
    %388 = vmatpush.bf16.msra.mxu0 %v330
    %389 = vmatmul.bf16.gmra.mxu0 %v355
    %v390 = vpop.f32.mrf.mxu0
    %v391 = vadd.f32 0.0, %v390
    %v392 = vpop.f32.mrf.mxu0
    %v393 = vadd.f32 0.0, %v392
    %394 = vdwg.mxu0
    %395 = vmatpush.bf16.msra.mxu0 0
    %396 = vmatpush.bf16.msra.mxu0 0
    %397 = vmatpush.bf16.msra.mxu0 0
    %398 = vmatpush.bf16.msra.mxu0 0
    %399 = vmatpush.bf16.msra.mxu0 0
    %400 = vmatpush.bf16.msra.mxu0 0
    %401 = vmatpush.bf16.msra.mxu0 %v361
    %402 = vmatpush.bf16.msra.mxu0 %v331
    %403 = vmatmul.bf16.gmra.mxu0 %v355
    %v404 = vpop.f32.mrf.mxu0
    %v405 = vadd.f32 0.0, %v404
    %v406 = vpop.f32.mrf.mxu0
    %v407 = vadd.f32 0.0, %v406
    %408 = vdwg.mxu0
    %409 = vmatpush.bf16.msra.mxu0 0
    %410 = vmatpush.bf16.msra.mxu0 0
    %411 = vmatpush.bf16.msra.mxu0 0
    %412 = vmatpush.bf16.msra.mxu0 0
    %413 = vmatpush.bf16.msra.mxu0 0
    %414 = vmatpush.bf16.msra.mxu0 0
    %415 = vmatpush.bf16.msra.mxu0 %v364
    %416 = vmatpush.bf16.msra.mxu0 %v332
    %417 = vmatmul.bf16.gmra.mxu0 %v355
    %v418 = vpop.f32.mrf.mxu0
    %v419 = vadd.f32 0.0, %v418
    %v420 = vpop.f32.mrf.mxu0
    %v421 = vadd.f32 0.0, %v420
    %422 = vdwg.mxu0
    %423 = vmatpush.bf16.msra.mxu0 0
    %424 = vmatpush.bf16.msra.mxu0 0
    %425 = vmatpush.bf16.msra.mxu0 0
    %426 = vmatpush.bf16.msra.mxu0 0
    %427 = vmatpush.bf16.msra.mxu0 0
    %428 = vmatpush.bf16.msra.mxu0 0
    %429 = vmatpush.bf16.msra.mxu0 %v367
    %430 = vmatpush.bf16.msra.mxu0 %v333
    %431 = vmatmul.bf16.gmra.mxu0 %v355
    %v432 = vpop.f32.mrf.mxu0
    %v433 = vadd.f32 0.0, %v432
    %v434 = vpop.f32.mrf.mxu0
    %v435 = vadd.f32 0.0, %v434
    %436 = vdwg.mxu0
    %437 = vmatpush.bf16.msra.mxu0 0
    %438 = vmatpush.bf16.msra.mxu0 0
    %439 = vmatpush.bf16.msra.mxu0 0
    %440 = vmatpush.bf16.msra.mxu0 0
    %441 = vmatpush.bf16.msra.mxu0 0
    %442 = vmatpush.bf16.msra.mxu0 0
    %443 = vmatpush.bf16.msra.mxu0 %v370
    %444 = vmatpush.bf16.msra.mxu0 %v334
    %445 = vmatmul.bf16.gmra.mxu0 %v355
    %v446 = vpop.f32.mrf.mxu0
    %v447 = vadd.f32 0.0, %v446
    %v448 = vpop.f32.mrf.mxu0
    %v449 = vadd.f32 0.0, %v448
    %450 = vdwg.mxu0
    %451 = vmatpush.bf16.msra.mxu0 0
    %452 = vmatpush.bf16.msra.mxu0 0
    %453 = vmatpush.bf16.msra.mxu0 0
    %454 = vmatpush.bf16.msra.mxu0 0
    %455 = vmatpush.bf16.msra.mxu0 0
    %456 = vmatpush.bf16.msra.mxu0 0
    %457 = vmatpush.bf16.msra.mxu0 %v373
    %458 = vmatpush.bf16.msra.mxu0 %v335
    %459 = vmatmul.bf16.gmra.mxu0 %v355
    %v460 = vpop.f32.mrf.mxu0
    %v461 = vadd.f32 0.0, %v460
    %v462 = vpop.f32.mrf.mxu0
    %v463 = vadd.f32 0.0, %v462
    %464 = vdwg.mxu0
    %465 = vmatpush.bf16.msra.mxu0 0
    %466 = vmatpush.bf16.msra.mxu0 0
    %467 = vmatpush.bf16.msra.mxu0 0
    %468 = vmatpush.bf16.msra.mxu0 0
    %469 = vmatpush.bf16.msra.mxu0 0
    %470 = vmatpush.bf16.msra.mxu0 0
    %471 = vmatpush.bf16.msra.mxu0 %v376
    %472 = vmatpush.bf16.msra.mxu0 %v336
    %473 = vmatmul.bf16.gmra.mxu0 %v355
    %v474 = vpop.f32.mrf.mxu0
    %v475 = vadd.f32 0.0, %v474
    %v476 = vpop.f32.mrf.mxu0
    %v477 = vadd.f32 0.0, %v476
    %478 = vdwg.mxu0
    %479 = vmatpush.bf16.msra.mxu0 0
    %480 = vmatpush.bf16.msra.mxu0 0
    %481 = vmatpush.bf16.msra.mxu0 0
    %482 = vmatpush.bf16.msra.mxu0 0
    %483 = vmatpush.bf16.msra.mxu0 0
    %484 = vmatpush.bf16.msra.mxu0 0
    %485 = vmatpush.bf16.msra.mxu0 %v379
    %486 = vmatpush.bf16.msra.mxu0 %v337
    %487 = vmatmul.bf16.gmra.mxu0 %v355
    %v488 = vpop.f32.mrf.mxu0
    %v489 = vadd.f32 0.0, %v488
    %v490 = vpop.f32.mrf.mxu0
    %v491 = vadd.f32 0.0, %v490
    %492 = vdwg.mxu0
    %v493 = vpack.c.bf16 %v277, %v263
    %v494 = vpack.c.bf16 %v191, %v191
    %495 = vmatpush.bf16.xpose.msra.mxu0 0
    %496 = vmatpush.bf16.xpose.msra.mxu0 0
    %497 = vmatpush.bf16.xpose.msra.mxu0 0
    %498 = vmatpush.bf16.xpose.msra.mxu0 0
    %499 = vmatpush.bf16.xpose.msra.mxu0 0
    %500 = vmatpush.bf16.xpose.msra.mxu0 0
    %501 = vmatpush.bf16.xpose.msra.mxu0 0
    %502 = vmatpush.bf16.xpose.msra.mxu0 %v494
    %503 = vmatmul.bf16.gmra.mxu0 %v493
    %v504 = vpop.f32.mrf.mxu0
    %v505 = vadd.f32 0.0, %v504
    %v506 = vpop.f32.mrf.mxu0
    %507 = vdwg.mxu0
    %v509 = vunpack.c.h.b16 %v493
    %v510 = vpack.c.b16 %v509, %v509
    %512 = vmatpush.bf16.xpose.msra.mxu0 0
    %513 = vmatpush.bf16.xpose.msra.mxu0 0
    %514 = vmatpush.bf16.xpose.msra.mxu0 0
    %515 = vmatpush.bf16.xpose.msra.mxu0 0
    %516 = vmatpush.bf16.xpose.msra.mxu0 0
    %517 = vmatpush.bf16.xpose.msra.mxu0 0
    %518 = vmatpush.bf16.xpose.msra.mxu0 0
    %519 = vmatpush.bf16.xpose.msra.mxu0 %v494
    %520 = vmatmul.bf16.gmra.mxu0 %v510
    %v521 = vpop.f32.mrf.mxu0
    %v522 = vadd.f32 0.0, %v521
    %v523 = vpop.f32.mrf.mxu0
    %524 = vdwg.mxu0
    %v525 = vpack.c.bf16 %v405, %v391
    %v526 = vpack.c.bf16 %v433, %v419
    %v527 = vpack.c.bf16 %v461, %v447
    %v528 = vpack.c.bf16 %v489, %v475
    %v529 = vpack.c.bf16 %v219, %v219
    %530 = vmatpush.bf16.xpose.msra.mxu0 0
    %531 = vmatpush.bf16.xpose.msra.mxu0 0
    %532 = vmatpush.bf16.xpose.msra.mxu0 0
    %533 = vmatpush.bf16.xpose.msra.mxu0 0
    %534 = vmatpush.bf16.xpose.msra.mxu0 0
    %535 = vmatpush.bf16.xpose.msra.mxu0 0
    %536 = vmatpush.bf16.xpose.msra.mxu0 0
    %537 = vmatpush.bf16.xpose.msra.mxu0 %v529
    %538 = vmatmul.bf16.gmra.mxu0 %v525
    %v539 = vpop.f32.mrf.mxu0
    %v540 = vadd.f32 0.0, %v539
    %v541 = vpop.f32.mrf.mxu0
    %542 = vdwg.mxu0
    %v544 = vunpack.c.h.b16 %v525
    %v545 = vpack.c.b16 %v544, %v544
    %547 = vmatpush.bf16.xpose.msra.mxu0 0
    %548 = vmatpush.bf16.xpose.msra.mxu0 0
    %549 = vmatpush.bf16.xpose.msra.mxu0 0
    %550 = vmatpush.bf16.xpose.msra.mxu0 0
    %551 = vmatpush.bf16.xpose.msra.mxu0 0
    %552 = vmatpush.bf16.xpose.msra.mxu0 0
    %553 = vmatpush.bf16.xpose.msra.mxu0 0
    %554 = vmatpush.bf16.xpose.msra.mxu0 %v529
    %555 = vmatmul.bf16.gmra.mxu0 %v545
    %v556 = vpop.f32.mrf.mxu0
    %v557 = vadd.f32 0.0, %v556
    %v558 = vpop.f32.mrf.mxu0
    %559 = vdwg.mxu0
    %560 = vmatpush.bf16.xpose.msra.mxu0 0
    %561 = vmatpush.bf16.xpose.msra.mxu0 0
    %562 = vmatpush.bf16.xpose.msra.mxu0 0
    %563 = vmatpush.bf16.xpose.msra.mxu0 0
    %564 = vmatpush.bf16.xpose.msra.mxu0 0
    %565 = vmatpush.bf16.xpose.msra.mxu0 0
    %566 = vmatpush.bf16.xpose.msra.mxu0 0
    %567 = vmatpush.bf16.xpose.msra.mxu0 %v529
    %568 = vmatmul.bf16.gmra.mxu0 %v526
    %v569 = vpop.f32.mrf.mxu0
    %v570 = vadd.f32 0.0, %v569
    %v571 = vpop.f32.mrf.mxu0
    %572 = vdwg.mxu0
    %v574 = vunpack.c.h.b16 %v526
    %v575 = vpack.c.b16 %v574, %v574
    %577 = vmatpush.bf16.xpose.msra.mxu0 0
    %578 = vmatpush.bf16.xpose.msra.mxu0 0
    %579 = vmatpush.bf16.xpose.msra.mxu0 0
    %580 = vmatpush.bf16.xpose.msra.mxu0 0
    %581 = vmatpush.bf16.xpose.msra.mxu0 0
    %582 = vmatpush.bf16.xpose.msra.mxu0 0
    %583 = vmatpush.bf16.xpose.msra.mxu0 0
    %584 = vmatpush.bf16.xpose.msra.mxu0 %v529
    %585 = vmatmul.bf16.gmra.mxu0 %v575
    %v586 = vpop.f32.mrf.mxu0
    %v587 = vadd.f32 0.0, %v586
    %v588 = vpop.f32.mrf.mxu0
    %589 = vdwg.mxu0
    %590 = vmatpush.bf16.xpose.msra.mxu0 0
    %591 = vmatpush.bf16.xpose.msra.mxu0 0
    %592 = vmatpush.bf16.xpose.msra.mxu0 0
    %593 = vmatpush.bf16.xpose.msra.mxu0 0
    %594 = vmatpush.bf16.xpose.msra.mxu0 0
    %595 = vmatpush.bf16.xpose.msra.mxu0 0
    %596 = vmatpush.bf16.xpose.msra.mxu0 0
    %597 = vmatpush.bf16.xpose.msra.mxu0 %v529
    %598 = vmatmul.bf16.gmra.mxu0 %v527
    %v599 = vpop.f32.mrf.mxu0
    %v600 = vadd.f32 0.0, %v599
    %v601 = vpop.f32.mrf.mxu0
    %602 = vdwg.mxu0
    %v604 = vunpack.c.h.b16 %v527
    %v605 = vpack.c.b16 %v604, %v604
    %607 = vmatpush.bf16.xpose.msra.mxu0 0
    %608 = vmatpush.bf16.xpose.msra.mxu0 0
    %609 = vmatpush.bf16.xpose.msra.mxu0 0
    %610 = vmatpush.bf16.xpose.msra.mxu0 0
    %611 = vmatpush.bf16.xpose.msra.mxu0 0
    %612 = vmatpush.bf16.xpose.msra.mxu0 0
    %613 = vmatpush.bf16.xpose.msra.mxu0 0
    %614 = vmatpush.bf16.xpose.msra.mxu0 %v529
    %615 = vmatmul.bf16.gmra.mxu0 %v605
    %v616 = vpop.f32.mrf.mxu0
    %v617 = vadd.f32 0.0, %v616
    %v618 = vpop.f32.mrf.mxu0
    %619 = vdwg.mxu0
    %620 = vmatpush.bf16.xpose.msra.mxu0 0
    %621 = vmatpush.bf16.xpose.msra.mxu0 0
    %622 = vmatpush.bf16.xpose.msra.mxu0 0
    %623 = vmatpush.bf16.xpose.msra.mxu0 0
    %624 = vmatpush.bf16.xpose.msra.mxu0 0
    %625 = vmatpush.bf16.xpose.msra.mxu0 0
    %626 = vmatpush.bf16.xpose.msra.mxu0 0
    %627 = vmatpush.bf16.xpose.msra.mxu0 %v529
    %628 = vmatmul.bf16.gmra.mxu0 %v528
    %v629 = vpop.f32.mrf.mxu0
    %v630 = vadd.f32 0.0, %v629
    %v631 = vpop.f32.mrf.mxu0
    %632 = vdwg.mxu0
    %v634 = vunpack.c.h.b16 %v528
    %v635 = vpack.c.b16 %v634, %v634
    %637 = vmatpush.bf16.xpose.msra.mxu0 0
    %638 = vmatpush.bf16.xpose.msra.mxu0 0
    %639 = vmatpush.bf16.xpose.msra.mxu0 0
    %640 = vmatpush.bf16.xpose.msra.mxu0 0
    %641 = vmatpush.bf16.xpose.msra.mxu0 0
    %642 = vmatpush.bf16.xpose.msra.mxu0 0
    %643 = vmatpush.bf16.xpose.msra.mxu0 0
    %644 = vmatpush.bf16.xpose.msra.mxu0 %v529
    %645 = vmatmul.bf16.gmra.mxu0 %v635
    %v646 = vpop.f32.mrf.mxu0
    %v647 = vadd.f32 0.0, %v646
    %v648 = vpop.f32.mrf.mxu0
    %649 = vdwg.mxu0
    %651 = vrot.lane.b32.xlu0 %v522, 8
    %v652 = vpop.permute.xlu0 %651
    %655 = vrot.lane.b32.xlu0 %v540, 16
    %v656 = vpop.permute.xlu0 %655
    %659 = vrot.lane.b32.xlu0 %v557, 24
    %v660 = vpop.permute.xlu0 %659
    %663 = vrot.lane.b32.xlu0 %v570, 32
    %v664 = vpop.permute.xlu0 %663
    %667 = vrot.lane.b32.xlu0 %v587, 40
    %v668 = vpop.permute.xlu0 %667
    %671 = vrot.lane.b32.xlu0 %v600, 48
    %v672 = vpop.permute.xlu0 %671
    %675 = vrot.lane.b32.xlu0 %v617, 56
    %v676 = vpop.permute.xlu0 %675
    %679 = vrot.lane.b32.xlu0 %v630, 64
    %v680 = vpop.permute.xlu0 %679
    %683 = vrot.lane.b32.xlu0 %v647, 72
    %v684 = vpop.permute.xlu0 %683
    %vm686 = vcmask 64512
    %v687 = vsel %vm686, %v505, %v652
    %vm688 = vcmask 130048
    %v689 = vsel %vm688, %v687, %v656
    %v690 = vsel %vm242, %v689, %v660
    %v691 = vsel %vm163, %v690, %v664
    %vm692 = vcmask 326656
    %v693 = vsel %vm692, %v691, %v668
    %vm694 = vcmask 392192
    %v695 = vsel %vm694, %v693, %v672
    %vm696 = vcmask 457728
    %v697 = vsel %vm696, %v695, %v676
    %vm698 = vcmask 523264
    %v699 = vsel %vm698, %v697, %v680
    %vm700 = vcmask 588800
    %v701 = vsel %vm700, %v699, %v684
    %v702 = vpack.c.bf16 %v279, %v265
    %v703 = vpack.c.bf16 %v193, %v193
    %704 = vmatpush.bf16.xpose.msra.mxu0 0
    %705 = vmatpush.bf16.xpose.msra.mxu0 0
    %706 = vmatpush.bf16.xpose.msra.mxu0 0
    %707 = vmatpush.bf16.xpose.msra.mxu0 0
    %708 = vmatpush.bf16.xpose.msra.mxu0 0
    %709 = vmatpush.bf16.xpose.msra.mxu0 0
    %710 = vmatpush.bf16.xpose.msra.mxu0 0
    %711 = vmatpush.bf16.xpose.msra.mxu0 %v703
    %712 = vmatmul.bf16.gmra.mxu0 %v702
    %v713 = vpop.f32.mrf.mxu0
    %v714 = vadd.f32 0.0, %v713
    %v715 = vpop.f32.mrf.mxu0
    %716 = vdwg.mxu0
    %v718 = vunpack.c.h.b16 %v702
    %v719 = vpack.c.b16 %v718, %v718
    %721 = vmatpush.bf16.xpose.msra.mxu0 0
    %722 = vmatpush.bf16.xpose.msra.mxu0 0
    %723 = vmatpush.bf16.xpose.msra.mxu0 0
    %724 = vmatpush.bf16.xpose.msra.mxu0 0
    %725 = vmatpush.bf16.xpose.msra.mxu0 0
    %726 = vmatpush.bf16.xpose.msra.mxu0 0
    %727 = vmatpush.bf16.xpose.msra.mxu0 0
    %728 = vmatpush.bf16.xpose.msra.mxu0 %v703
    %729 = vmatmul.bf16.gmra.mxu0 %v719
    %v730 = vpop.f32.mrf.mxu0
    %v731 = vadd.f32 0.0, %v730
    %v732 = vpop.f32.mrf.mxu0
    %733 = vdwg.mxu0
    %v734 = vpack.c.bf16 %v407, %v393
    %v735 = vpack.c.bf16 %v435, %v421
    %v736 = vpack.c.bf16 %v463, %v449
    %v737 = vpack.c.bf16 %v491, %v477
    %v738 = vpack.c.bf16 %v221, %v221
    %739 = vmatpush.bf16.xpose.msra.mxu0 0
    %740 = vmatpush.bf16.xpose.msra.mxu0 0
    %741 = vmatpush.bf16.xpose.msra.mxu0 0
    %742 = vmatpush.bf16.xpose.msra.mxu0 0
    %743 = vmatpush.bf16.xpose.msra.mxu0 0
    %744 = vmatpush.bf16.xpose.msra.mxu0 0
    %745 = vmatpush.bf16.xpose.msra.mxu0 0
    %746 = vmatpush.bf16.xpose.msra.mxu0 %v738
    %747 = vmatmul.bf16.gmra.mxu0 %v734
    %v748 = vpop.f32.mrf.mxu0
    %v749 = vadd.f32 0.0, %v748
    %v750 = vpop.f32.mrf.mxu0
    %751 = vdwg.mxu0
    %v753 = vunpack.c.h.b16 %v734
    %v754 = vpack.c.b16 %v753, %v753
    %756 = vmatpush.bf16.xpose.msra.mxu0 0
    %757 = vmatpush.bf16.xpose.msra.mxu0 0
    %758 = vmatpush.bf16.xpose.msra.mxu0 0
    %759 = vmatpush.bf16.xpose.msra.mxu0 0
    %760 = vmatpush.bf16.xpose.msra.mxu0 0
    %761 = vmatpush.bf16.xpose.msra.mxu0 0
    %762 = vmatpush.bf16.xpose.msra.mxu0 0
    %763 = vmatpush.bf16.xpose.msra.mxu0 %v738
    %764 = vmatmul.bf16.gmra.mxu0 %v754
    %v765 = vpop.f32.mrf.mxu0
    %v766 = vadd.f32 0.0, %v765
    %v767 = vpop.f32.mrf.mxu0
    %768 = vdwg.mxu0
    %769 = vmatpush.bf16.xpose.msra.mxu0 0
    %770 = vmatpush.bf16.xpose.msra.mxu0 0
    %771 = vmatpush.bf16.xpose.msra.mxu0 0
    %772 = vmatpush.bf16.xpose.msra.mxu0 0
    %773 = vmatpush.bf16.xpose.msra.mxu0 0
    %774 = vmatpush.bf16.xpose.msra.mxu0 0
    %775 = vmatpush.bf16.xpose.msra.mxu0 0
    %776 = vmatpush.bf16.xpose.msra.mxu0 %v738
    %777 = vmatmul.bf16.gmra.mxu0 %v735
    %v778 = vpop.f32.mrf.mxu0
    %v779 = vadd.f32 0.0, %v778
    %v780 = vpop.f32.mrf.mxu0
    %781 = vdwg.mxu0
    %v783 = vunpack.c.h.b16 %v735
    %v784 = vpack.c.b16 %v783, %v783
    %786 = vmatpush.bf16.xpose.msra.mxu0 0
    %787 = vmatpush.bf16.xpose.msra.mxu0 0
    %788 = vmatpush.bf16.xpose.msra.mxu0 0
    %789 = vmatpush.bf16.xpose.msra.mxu0 0
    %790 = vmatpush.bf16.xpose.msra.mxu0 0
    %791 = vmatpush.bf16.xpose.msra.mxu0 0
    %792 = vmatpush.bf16.xpose.msra.mxu0 0
    %793 = vmatpush.bf16.xpose.msra.mxu0 %v738
    %794 = vmatmul.bf16.gmra.mxu0 %v784
    %v795 = vpop.f32.mrf.mxu0
    %v796 = vadd.f32 0.0, %v795
    %v797 = vpop.f32.mrf.mxu0
    %798 = vdwg.mxu0
    %799 = vmatpush.bf16.xpose.msra.mxu0 0
    %800 = vmatpush.bf16.xpose.msra.mxu0 0
    %801 = vmatpush.bf16.xpose.msra.mxu0 0
    %802 = vmatpush.bf16.xpose.msra.mxu0 0
    %803 = vmatpush.bf16.xpose.msra.mxu0 0
    %804 = vmatpush.bf16.xpose.msra.mxu0 0
    %805 = vmatpush.bf16.xpose.msra.mxu0 0
    %806 = vmatpush.bf16.xpose.msra.mxu0 %v738
    %807 = vmatmul.bf16.gmra.mxu0 %v736
    %v808 = vpop.f32.mrf.mxu0
    %v809 = vadd.f32 0.0, %v808
    %v810 = vpop.f32.mrf.mxu0
    %811 = vdwg.mxu0
    %v813 = vunpack.c.h.b16 %v736
    %v814 = vpack.c.b16 %v813, %v813
    %816 = vmatpush.bf16.xpose.msra.mxu0 0
    %817 = vmatpush.bf16.xpose.msra.mxu0 0
    %818 = vmatpush.bf16.xpose.msra.mxu0 0
    %819 = vmatpush.bf16.xpose.msra.mxu0 0
    %820 = vmatpush.bf16.xpose.msra.mxu0 0
    %821 = vmatpush.bf16.xpose.msra.mxu0 0
    %822 = vmatpush.bf16.xpose.msra.mxu0 0
    %823 = vmatpush.bf16.xpose.msra.mxu0 %v738
    %824 = vmatmul.bf16.gmra.mxu0 %v814
    %v825 = vpop.f32.mrf.mxu0
    %v826 = vadd.f32 0.0, %v825
    %v827 = vpop.f32.mrf.mxu0
    %828 = vdwg.mxu0
    %829 = vmatpush.bf16.xpose.msra.mxu0 0
    %830 = vmatpush.bf16.xpose.msra.mxu0 0
    %831 = vmatpush.bf16.xpose.msra.mxu0 0
    %832 = vmatpush.bf16.xpose.msra.mxu0 0
    %833 = vmatpush.bf16.xpose.msra.mxu0 0
    %834 = vmatpush.bf16.xpose.msra.mxu0 0
    %835 = vmatpush.bf16.xpose.msra.mxu0 0
    %836 = vmatpush.bf16.xpose.msra.mxu0 %v738
    %837 = vmatmul.bf16.gmra.mxu0 %v737
    %v838 = vpop.f32.mrf.mxu0
    %v839 = vadd.f32 0.0, %v838
    %v840 = vpop.f32.mrf.mxu0
    %841 = vdwg.mxu0
    %v843 = vunpack.c.h.b16 %v737
    %v844 = vpack.c.b16 %v843, %v843
    %846 = vmatpush.bf16.xpose.msra.mxu0 0
    %847 = vmatpush.bf16.xpose.msra.mxu0 0
    %848 = vmatpush.bf16.xpose.msra.mxu0 0
    %849 = vmatpush.bf16.xpose.msra.mxu0 0
    %850 = vmatpush.bf16.xpose.msra.mxu0 0
    %851 = vmatpush.bf16.xpose.msra.mxu0 0
    %852 = vmatpush.bf16.xpose.msra.mxu0 0
    %853 = vmatpush.bf16.xpose.msra.mxu0 %v738
    %854 = vmatmul.bf16.gmra.mxu0 %v844
    %v855 = vpop.f32.mrf.mxu0
    %v856 = vadd.f32 0.0, %v855
    %v857 = vpop.f32.mrf.mxu0
    %858 = vdwg.mxu0
    %860 = vrot.lane.b32.xlu0 %v731, 8
    %v861 = vpop.permute.xlu0 %860
    %864 = vrot.lane.b32.xlu0 %v749, 16
    %v865 = vpop.permute.xlu0 %864
    %868 = vrot.lane.b32.xlu0 %v766, 24
    %v869 = vpop.permute.xlu0 %868
    %872 = vrot.lane.b32.xlu0 %v779, 32
    %v873 = vpop.permute.xlu0 %872
    %876 = vrot.lane.b32.xlu0 %v796, 40
    %v877 = vpop.permute.xlu0 %876
    %880 = vrot.lane.b32.xlu0 %v809, 48
    %v881 = vpop.permute.xlu0 %880
    %884 = vrot.lane.b32.xlu0 %v826, 56
    %v885 = vpop.permute.xlu0 %884
    %888 = vrot.lane.b32.xlu0 %v839, 64
    %v889 = vpop.permute.xlu0 %888
    %892 = vrot.lane.b32.xlu0 %v856, 72
    %v893 = vpop.permute.xlu0 %892
    %v895 = vsel %vm686, %v714, %v861
    %v896 = vsel %vm688, %v895, %v865
    %v897 = vsel %vm242, %v896, %v869
    %v898 = vsel %vm163, %v897, %v873
    %v899 = vsel %vm692, %v898, %v877
    %v900 = vsel %vm694, %v899, %v881
    %v901 = vsel %vm696, %v900, %v885
    %v902 = vsel %vm698, %v901, %v889
    %v903 = vsel %vm700, %v902, %v893
    %vm904 = vcmask 654336
    %905 = vst.msk [vmem:[#allocation11] sm:$0xff] %vm904, %v701
    %906 = vst.msk [vmem:[#allocation11 + $0x8] sm:$0xff] %vm904, %v903
    // Predicated region
    $region42: #{tpu_custom_call.1} parent=1 // pred_check
      _
    $region43: #{tpu_custom_call.1} parent=1 // pred_check_branch
      %908 = sbr.rel (0) target = $region45
    $region44: #{tpu_custom_call.1} parent=1 // pred_region
      %910 = vsyncadd [#allocation4], 0
      %s911 = sshll.u32 [#allocation11], 4
      %s912 = int_to_ptr.vmem [resolvable:$true] %s911
      %s913 = sshll.u32 %s5, 4
      %s914 = int_to_ptr.hbm [resolvable:$true] %s913
      %919 = dma.vmem_to_hbm [thread:$0]  %s912, 256, %s914, [#allocation4], 128, 128, 8
    $region45: #{tpu_custom_call.1} parent=1 // pred_fallthru
      _
    // Predicated region
    $region46: #{tpu_custom_call.1} parent=1 // pred_check
      _
    $region47: #{tpu_custom_call.1} parent=1 // pred_check_branch
      %921 = sbr.rel (0) target = $region49
    $region48: #{tpu_custom_call.1} parent=1 // pred_region
      %923 = dma.done [#allocation4], 256
    $region49: #{tpu_custom_call.1} parent=1 // pred_fallthru
      _
    %924 = vsyncpa [#allocation3], 1
    %925 = vsyncpa [#allocation6], 1
    %926 = vsyncpa [#allocation9], 1
    %927 = vsyncpa [#allocation4], 1

</llo_original>
